<compile_context>
chip_gen: v7x
topology: tpu7x:2x2x1
jax: 0.10.0
libtpu: 0.0.40
codegen_flags: <defaults>
</compile_context>

<pallas_src>
import functools

import jax
import jax.numpy as jnp
import numpy as np
from jax.experimental import pallas as pl
from jax.experimental.pallas import tpu as pltpu


_TARGET_BLOCK_BYTES = 2 * 1024 * 1024   # per input block (x2 for double buffering)
_MAX_TILE_W = 2048                      # multiple of 128
_TINY_FALLBACK_ELEMS = 1024             # below this, plain XLA fusion is faster


def _round_up(x, m):
    return ((x + m - 1) // m) * m


def _row_max_kernel(x_ref, o_ref, *, tile_w, w_total, mask_last):
    """x_ref: (tile_r, tile_w) input block; o_ref: (1, 1, tile_r) lane-dense out."""
    j = pl.program_id(1)                      # reduction-axis grid step
    x = x_ref[...]

    if mask_last:
        # The last W block may run past the array edge; mask padded lanes with
        # the identity for max so garbage never wins.
        lane = jax.lax.broadcasted_iota(jnp.int32, x.shape, 1)
        if jnp.issubdtype(x.dtype, jnp.floating):
            fill = jnp.array(-jnp.inf, dtype=x.dtype)
        else:
            fill = jnp.array(jnp.iinfo(x.dtype).min, dtype=x.dtype)
        x = jnp.where(j * tile_w + lane < w_total, x, fill)

    # Reduce over lanes, then relayout sublane->lane (XLU, idle in this
    # mem-bound kernel) so the stored output block is lane-dense.
    part = jnp.max(x, axis=-1)[None, None, :]          # (1, 1, tile_r)

    @pl.when(j == 0)
    def _():
        o_ref[...] = part

    @pl.when(j > 0)
    def _():
        o_ref[...] = jnp.maximum(o_ref[...], part)


@functools.partial(jax.jit, static_argnames=("dim",))
def global_max_pooling(x, dim=-1):
    """Equivalent of torch: x.max(dim=dim)[0] (values only)."""
    ndim = x.ndim
    dim = dim % ndim
    if dim != ndim - 1:
        # TODO(synk): for non-last reduction dims this materializes a full HBM
        # transpose; a fused variant would reduce over the native axis instead.
        x = jnp.moveaxis(x, dim, -1)

    lead_shape = x.shape[:-1]
    W = x.shape[-1]
    R = int(np.prod(lead_shape)) if lead_shape else 1

    # Tiny / degenerate inputs: launch + per-step overhead dominates.
    if R == 0 or R * W < _TINY_FALLBACK_ELEMS:
        return jnp.max(x, axis=-1)

    x2 = x.reshape(R, W)
    dtype_bytes = jnp.dtype(x.dtype).itemsize

    # --- Tile selection -----------------------------------------------------
    tile_w = W if W <= _MAX_TILE_W else _MAX_TILE_W          # mult of 128 or == W
    tile_r_budget = max(8, (_TARGET_BLOCK_BYTES // (tile_w * dtype_bytes)) // 8 * 8)
    tile_r = min(tile_r_budget, _round_up(R, 8))
    # Keep >= 2 row-grid steps when possible so both v7x TensorCores get work.
    if R > 8 and pl.cdiv(R, tile_r) < 2:
        tile_r = max(8, _round_up(pl.cdiv(R, 2), 8))

    num_row_tiles = pl.cdiv(R, tile_r)
    num_w_tiles = pl.cdiv(W, tile_w)
    mask_last = (W % tile_w) != 0

    kernel = functools.partial(
        _row_max_kernel, tile_w=tile_w, w_total=W, mask_last=mask_last)

    out = pl.pallas_call(
        kernel,
        out_shape=jax.ShapeDtypeStruct((num_row_tiles, 1, tile_r), x.dtype),
        grid_spec=pltpu.PrefetchScalarGridSpec(
            num_scalar_prefetch=0,
            grid=(num_row_tiles, num_w_tiles),
            in_specs=[pl.BlockSpec((tile_r, tile_w), lambda i, j: (i, j))],
            out_specs=pl.BlockSpec((1, 1, tile_r), lambda i, j: (i, 0, 0)),
        ),
        compiler_params=pltpu.CompilerParams(
            dimension_semantics=("parallel", "arbitrary")),
    )(x2)

    out_flat = out.reshape(num_row_tiles * tile_r)[:R]
    return out_flat.reshape(lead_shape)


if __name__ == "__main__":
    key = jax.random.PRNGKey(0)
    k1, k2, k3 = jax.random.split(key, 3)

    # Case 1: NCHW conv feature map, module default dim=-1.
    x1 = jax.random.normal(k1, (2, 4, 16, 16), dtype=jnp.float32)
    y1 = jax.block_until_ready(global_max_pooling(x1, dim=-1))
    r1 = jnp.max(x1, axis=-1)
    assert y1.shape == r1.shape == (2, 4, 16)
    np.testing.assert_array_equal(np.asarray(y1), np.asarray(r1))

    # Case 2: long reduction axis -> exercises the W-tiled accumulator path
    # including the masked partial last W block (2500 = 2048 + 452).
    x2 = jax.random.normal(k2, (2, 4, 2500), dtype=jnp.float32)
    y2 = jax.block_until_ready(global_max_pooling(x2, dim=-1))
    np.testing.assert_array_equal(np.asarray(y2), np.asarray(jnp.max(x2, axis=-1)))

    # Case 3: non-last dim + row count not a multiple of 8 (padded last row block).
    x3 = jax.random.normal(k3, (3, 5, 7, 13), dtype=jnp.float32)
    y3 = jax.block_until_ready(global_max_pooling(x3, dim=1))
    np.testing.assert_array_equal(np.asarray(y3), np.asarray(jnp.max(x3, axis=1)))

    print("KERNEL_OK")
</pallas_src>

<mosaic_0001>
module attributes {stable_mosaic.version = 11 : i64} {
  func.func @_row_max_kernel(%arg0: i32, %arg1: i32, %arg2: memref<64x16xf32, #tpu.memory_space<vmem>>, %arg3: memref<1x1x64xf32, #tpu.memory_space<vmem>>) attributes {dimension_semantics = [#tpu.dimension_semantics<parallel>, #tpu.dimension_semantics<arbitrary>], iteration_bounds = array<i64: 2, 1>, scalar_prefetch = 0 : i64, scratch_operands = 0 : i64, tpu.core_type = #tpu.core_type<tc>, window_params = [{transform_indices = @transform_0, window_bounds = array<i64: 64, 16>}, {transform_indices = @transform_1, window_bounds = array<i64: 1, 1, 64>}]} {
    %c0 = arith.constant 0 : index
    %c0_0 = arith.constant 0 : index
    %0 = vector.load %arg2[%c0, %c0_0] : memref<64x16xf32, #tpu.memory_space<vmem>>, vector<64x16xf32>
    %cst = arith.constant dense<0xFF800000> : vector<64xf32>
    %1 = vector.multi_reduction <maximumf>, %0, %cst [1] : vector<64x16xf32> to vector<64xf32>
    %2 = vector.shape_cast %1 : vector<64xf32> to vector<1x1x64xf32>
    %c0_i32 = arith.constant 0 : i32
    %3 = arith.cmpi eq, %arg1, %c0_i32 : i32
    %4 = arith.extui %3 : i1 to i32
    %c0_i32_1 = arith.constant 0 : i32
    %5 = arith.cmpi ne, %4, %c0_i32_1 : i32
    scf.if %5 {
      %c0_4 = arith.constant 0 : index
      %c0_5 = arith.constant 0 : index
      %c0_6 = arith.constant 0 : index
      %9 = vector.load %arg3[%c0_4, %c0_5, %c0_6] : memref<1x1x64xf32, #tpu.memory_space<vmem>>, vector<1x1x64xf32>
      tpu.vector_store %arg3[%c0_4, %c0_5, %c0_6], %2 {strides = array<i32>} : memref<1x1x64xf32, #tpu.memory_space<vmem>>, vector<1x1x64xf32>,
    } else {
    }
    %c0_i32_2 = arith.constant 0 : i32
    %6 = arith.cmpi sgt, %arg1, %c0_i32_2 : i32
    %7 = arith.extui %6 : i1 to i32
    %c0_i32_3 = arith.constant 0 : i32
    %8 = arith.cmpi ne, %7, %c0_i32_3 : i32
    scf.if %8 {
      %c0_4 = arith.constant 0 : index
      %c0_5 = arith.constant 0 : index
      %c0_6 = arith.constant 0 : index
      %9 = vector.load %arg3[%c0_4, %c0_5, %c0_6] : memref<1x1x64xf32, #tpu.memory_space<vmem>>, vector<1x1x64xf32>
      %10 = arith.maximumf %9, %2 : vector<1x1x64xf32>
      %c0_7 = arith.constant 0 : index
      %c0_8 = arith.constant 0 : index
      %c0_9 = arith.constant 0 : index
      %11 = vector.load %arg3[%c0_7, %c0_8, %c0_9] : memref<1x1x64xf32, #tpu.memory_space<vmem>>, vector<1x1x64xf32>
      tpu.vector_store %arg3[%c0_7, %c0_8, %c0_9], %10 {strides = array<i32>} : memref<1x1x64xf32, #tpu.memory_space<vmem>>, vector<1x1x64xf32>,
    } else {
    }
    return
  }
  func.func @transform_0(%arg0: i32, %arg1: i32) -> (i32, i32) {
    %c0_i32 = arith.constant 0 : i32
    return %arg0, %arg1 : i32, i32
  }
  func.func @transform_1(%arg0: i32, %arg1: i32) -> (i32, i32, i32) {
    %c0_i32 = arith.constant 0 : i32
    %c0_i32_0 = arith.constant 0 : i32
    %c0_i32_1 = arith.constant 0 : i32
    return %arg0, %c0_i32, %c0_i32_0 : i32, i32, i32
  }
}

</mosaic_0001>

<llo_original>
// kernel: global_max_pooling.1
$region0: #{global_max_pooling.1}
  #allocation0 [shape = 'u32[]', space=smem, size = 0x4, offset = 0x4, fixed_abs, tag = 'smem constant byte address 0x4 - core index']
  #allocation1 [shape = 'u32[144,128]{1,0:T(1,128)}', space=vmem, size = 0x12000, scoped, tag = 'internal scratch']
  %s0 = inlined_call_operand.hbm [shape: f32[128,16], index: 0, kind: input, shape index: {}]
  %s1 = inlined_call_operand.vmem [shape: f32[2,1,64], index: 1, kind: output, shape index: {}]
  %s2 = sld [smem:[#allocation0]]
  $region49: #{global_max_pooling.1} parent=0
    _
  %s4 = ssub.s32 1, %s2
  %s5 = scalar_select 0, %s4, %s2
  $region1: #{global_max_pooling.1} parent=0
    #allocation2 [shape = 'u8[65536]{0}', space=vmem, size = 0x10000, scoped, tag = 'input window, operand 0']
    #allocation3 [shape = 's32[2]{0}', space=sflag, size = 0x8, scoped, tag = 'scoped memory for global_max_pooling.1']
    %6 = vsyncpa [#allocation3], 0
    %s7 = scalar_lea.sflag [#allocation3], 1
    %8 = vsyncpa %s7, 0
    loop: start=0, step=1, limit=4
    $region2: #{global_max_pooling.1} parent=1 // loop_pre_header
      _
    $region3: #{global_max_pooling.1} parent=1 // loop_header
      %s10 = sphi 0, %s14
      %p11 = scmp.ge.s32.totalorder %s10, 4
      %s17 = sphi 0, %s29
      %s18 = sphi 0, %s25
      %s19 = sphi 0, %s17
      %s20 = sphi 0, %s18
      %s21 = sphi 0, %s19
      %s22 = sphi 0, %s20
      %s34 = sphi 0, %s36
      %s37 = sphi 0, %s34
      %s38 = sphi 0, %s37
      %s54 = sphi 0, %s38
      %s60 = sphi 0, %s62
      %s63 = sphi 0, %s60
      %s64 = sphi 0, %s63
      %s80 = sphi 0, %s64
    $region4: #{global_max_pooling.1} parent=1 // loop_header_branch
      %13 = sbr.rel (%p11) target = $region8
    $region5: #{global_max_pooling.1} parent=1 // loop_body
      %s15 = ssub.s32 %s10, 1
      %s16 = ssub.s32 %s10, 2
      %s23 = sadd.s32 1, %s18
      %p24 = scmp.ge.s32.totalorder %s23, 1
      %s25 = scalar_select %p24, 0, %s23
      %s26 = sadd.s32 1, %s17
      %s27 = scalar_select %p24, %s26, %s17
      %p28 = scmp.ge.s32.totalorder %s27, 2
      %s29 = scalar_select %p28, 0, %s27
      %s30 = ssub.s32 %s17, %s29
      %s31 = ssub.s32 %s18, %s25
      %s32 = sor.u32 %s30, %s31
      %p33 = scmp.eq.s32.totalorder %s32, 0
      %s35 = sadd.s32 %s34, 1
      %s36 = scalar_select %p33, %s34, %s35
      %p39 = pneg %p33
      %p40 = scmp.eq.s32.totalorder %s10, 1
      %p41 = por %p39, %p40
      %p42 = scmp.ne.s32.totalorder %s34, %s37
      %p43 = scmp.eq.s32.totalorder %s10, 0
      %p44 = por %p42, %p43
      %p45 = scmp.ne.s32.totalorder %s34, %s37
      %p46 = scmp.eq.s32.totalorder %s15, 1
      %p47 = por %p45, %p46
      %p48 = scmp.ne.s32.totalorder %s37, %s38
      %p49 = scmp.eq.s32.totalorder %s15, 0
      %p50 = por %p48, %p49
      %p51 = scmp.ne.s32.totalorder %s37, %s38
      %p52 = scmp.eq.s32.totalorder %s16, 1
      %p53 = por %p51, %p52
      %p55 = scmp.ne.s32.totalorder %s38, %s54
      %p56 = scmp.eq.s32.totalorder %s16, 0
      %p57 = por %p55, %p56
      %s58 = ssub.s32 %s17, %s29
      %p59 = scmp.eq.s32.totalorder %s58, 0
      %s61 = sadd.s32 %s60, 1
      %s62 = scalar_select %p59, %s60, %s61
      %p65 = pneg %p59
      %p66 = scmp.eq.s32.totalorder %s10, 1
      %p67 = por %p65, %p66
      %p68 = scmp.ne.s32.totalorder %s60, %s63
      %p69 = scmp.eq.s32.totalorder %s10, 0
      %p70 = por %p68, %p69
      %p71 = scmp.ne.s32.totalorder %s60, %s63
      %p72 = scmp.eq.s32.totalorder %s15, 1
      %p73 = por %p71, %p72
      %p74 = scmp.ne.s32.totalorder %s63, %s64
      %p75 = scmp.eq.s32.totalorder %s15, 0
      %p76 = por %p74, %p75
      %p77 = scmp.ne.s32.totalorder %s63, %s64
      %p78 = scmp.eq.s32.totalorder %s16, 1
      %p79 = por %p77, %p78
      %p81 = scmp.ne.s32.totalorder %s64, %s80
      %p82 = scmp.eq.s32.totalorder %s16, 0
      %p83 = por %p81, %p82
      %p84 = scmp.le.s32.totalorder 1, %s10
      %p85 = scmp.lt.s32.totalorder %s10, 3
      %p86 = pnand %p84, %p85
      %p87 = pneg %p86
      // Predicated region
      $region9: #{global_max_pooling.1} parent=5 // pred_check
        _
      $region10: #{global_max_pooling.1} parent=5 // pred_check_branch
        %89 = sbr.rel (%p86) target = $region12
      $region11: #{global_max_pooling.1} parent=5 // pred_region
        %s90 = ssub.s32 %s10, 1
      $region12: #{global_max_pooling.1} parent=5 // pred_fallthru
        _
      %p91 = scmp.lt.s32.totalorder %s10, 2
      // Predicated region
      $region13: #{global_max_pooling.1} parent=5 // pred_check
        %p92 = pneg %p91
      $region14: #{global_max_pooling.1} parent=5 // pred_check_branch
        %94 = sbr.rel (%p92) target = $region16
      $region15: #{global_max_pooling.1} parent=5 // pred_region
        // Predicated region
        $region17: #{global_max_pooling.1} parent=15 // pred_check
          %p95 = pneg %p44
        $region18: #{global_max_pooling.1} parent=15 // pred_check_branch
          %97 = sbr.rel (%p95) target = $region20
        $region19: #{global_max_pooling.1} parent=15 // pred_region
          %s98 = sand.u32 %s34, 1
          %s99 = scalar_lea.sflag [#allocation3], %s98
          %s100 = sand.u32 %s34, 1
          %s101 = smul.addr %s100, 64
          %s102 = scalar_lea.vmem [#allocation2], %s101
          %s103 = smul.u32 8, %s17
          %s105 = ssub.s32 1024, 1024
          %106 = vsyncadd %s99, %s105
          %s107 = sadd.s32 %s18, %s103
          %s108 = smul.addr %s107, 128
          %s109 = scalar_lea.hbm %s0, %s108
          %s110 = sshll.u32 %s102, 4
          %s111 = int_to_ptr.vmem [resolvable:$true] %s110
          %116 = dma.hbm_to_vmem [thread:$0]  %s109, 1024, %s111, %s99, 128, 128, 8
        $region20: #{global_max_pooling.1} parent=15 // pred_fallthru
          _
      $region16: #{global_max_pooling.1} parent=5 // pred_fallthru
        _
      %p117 = scmp.le.s32.totalorder 1, %s10
      %p118 = scmp.lt.s32.totalorder %s10, 3
      %p119 = pnand %p117, %p118
      %p120 = pneg %p119
      // Predicated region
      $region21: #{global_max_pooling.1} parent=5 // pred_check
        _
      $region22: #{global_max_pooling.1} parent=5 // pred_check_branch
        %122 = sbr.rel (%p119) target = $region24
      $region23: #{global_max_pooling.1} parent=5 // pred_region
        %s123 = ssub.s32 %s10, 1
        %s124 = sand.u32 %s37, 1
        %s125 = scalar_lea.sflag [#allocation3], %s124
        %s126 = sand.u32 %s37, 1
        %s127 = smul.addr %s126, 64
        %s128 = scalar_lea.vmem [#allocation2], %s127
        // Predicated region
        $region25: #{global_max_pooling.1} parent=23 // pred_check
          %p129 = pneg %p50
        $region26: #{global_max_pooling.1} parent=23 // pred_check_branch
          %131 = sbr.rel (%p129) target = $region28
        $region27: #{global_max_pooling.1} parent=23 // pred_region
          %132 = dma.done %s125, 1024
        $region28: #{global_max_pooling.1} parent=23 // pred_fallthru
          _
        %s133 = sand.u32 %s37, 1
        %s134 = scalar_lea.sflag [#allocation3], %s133
        %s135 = sand.u32 %s37, 1
        %s136 = smul.addr %s135, 64
        %s137 = scalar_lea.vmem [#allocation2], %s136
        %p138 = pneg %p50
        %p139 = pneg %p47
        %p140 = pneg %p76
        %p141 = pneg %p73
        %p142 = scmp.lt.s32.totalorder %s19, 1
        %s143 = scalar_select %p142, %s19, 1
        %s144 = scalar_lea.vmem %s1, %s143
        %s145 = smul.u32 8, %s19
        %p146 = scmp.lt.s32.totalorder %s19, 1
        %s147 = scalar_select %p146, %s19, 1
        %s148 = scalar_lea.vmem %s1, %s147
        %v149 = vld [vmem:[%s128] sm:$0xff]
        %v150 = vld [vmem:[%s128 + $0x8] sm:$0xff]
        %v151 = vld [vmem:[%s128 + $0x10] sm:$0xff]
        %v152 = vld [vmem:[%s128 + $0x18] sm:$0xff]
        %v153 = vld [vmem:[%s128 + $0x20] sm:$0xff]
        %v154 = vld [vmem:[%s128 + $0x28] sm:$0xff]
        %v155 = vld [vmem:[%s128 + $0x30] sm:$0xff]
        %v156 = vld [vmem:[%s128 + $0x38] sm:$0xff]
        %vm157 = vcmask 130048
        %v158 = vsel %vm157, %v149, -inf
        %159 = vmax.xlane.f32.xlu0 %v158
        %v160 = vpop.xlane.xlu0 %159
        %v161 = vsel %vm157, %v150, -inf
        %162 = vmax.xlane.f32.xlu0 %v161
        %v163 = vpop.xlane.xlu0 %162
        %v164 = vsel %vm157, %v151, -inf
        %165 = vmax.xlane.f32.xlu0 %v164
        %v166 = vpop.xlane.xlu0 %165
        %v167 = vsel %vm157, %v152, -inf
        %168 = vmax.xlane.f32.xlu0 %v167
        %v169 = vpop.xlane.xlu0 %168
        %v170 = vsel %vm157, %v153, -inf
        %171 = vmax.xlane.f32.xlu0 %v170
        %v172 = vpop.xlane.xlu0 %171
        %v173 = vsel %vm157, %v154, -inf
        %174 = vmax.xlane.f32.xlu0 %v173
        %v175 = vpop.xlane.xlu0 %174
        %v176 = vsel %vm157, %v155, -inf
        %177 = vmax.xlane.f32.xlu0 %v176
        %v178 = vpop.xlane.xlu0 %177
        %v179 = vsel %vm157, %v156, -inf
        %180 = vmax.xlane.f32.xlu0 %v179
        %v181 = vpop.xlane.xlu0 %180
        %p182 = scmp.eq.s32.totalorder %s20, 0
        // Predicated region
        $region29: #{global_max_pooling.1} parent=23 // pred_check
          %p183 = pneg %p182
        $region30: #{global_max_pooling.1} parent=23 // pred_check_branch
          %185 = sbr.rel (%p183) target = $region32
        $region31: #{global_max_pooling.1} parent=23 // pred_region
          %v194 = vlaneseq
          %v195 = vand.u32 %v194, 127
          %v196 = vlaneseq
          %v197 = vshrl.u32 %v196, 7
          %v198 = vsub.s32 %v195, %v197
          %v199 = vrot.slane %v160, %v198
          %v200 = vadd.s32 %v195, 4294967288
          %v201 = vlaneseq
          %v202 = vshrl.u32 %v201, 7
          %v203 = vsub.s32 %v200, %v202
          %v204 = vrot.slane %v163, %v203
          %vm205 = vcmask 130112
          %v206 = vsel %vm205, %v204, %v199
          %v207 = vadd.s32 %v195, 4294967280
          %v208 = vlaneseq
          %v209 = vshrl.u32 %v208, 7
          %v210 = vsub.s32 %v207, %v209
          %v211 = vrot.slane %v166, %v210
          %vm212 = vcmask 195712
          %v213 = vsel %vm212, %v211, %v206
          %v214 = vadd.s32 %v195, 4294967272
          %v215 = vlaneseq
          %v216 = vshrl.u32 %v215, 7
          %v217 = vsub.s32 %v214, %v216
          %v218 = vrot.slane %v169, %v217
          %vm219 = vcmask 261312
          %v220 = vsel %vm219, %v218, %v213
          %v221 = vadd.s32 %v195, 4294967264
          %v222 = vlaneseq
          %v223 = vshrl.u32 %v222, 7
          %v224 = vsub.s32 %v221, %v223
          %v225 = vrot.slane %v172, %v224
          %vm226 = vcmask 326912
          %v227 = vsel %vm226, %v225, %v220
          %v228 = vadd.s32 %v195, 4294967256
          %v229 = vlaneseq
          %v230 = vshrl.u32 %v229, 7
          %v231 = vsub.s32 %v228, %v230
          %v232 = vrot.slane %v175, %v231
          %vm233 = vcmask 392512
          %v234 = vsel %vm233, %v232, %v227
          %v235 = vadd.s32 %v195, 4294967248
          %v236 = vlaneseq
          %v237 = vshrl.u32 %v236, 7
          %v238 = vsub.s32 %v235, %v237
          %v239 = vrot.slane %v178, %v238
          %vm240 = vcmask 458112
          %v241 = vsel %vm240, %v239, %v234
          %v242 = vadd.s32 %v195, 4294967240
          %v243 = vlaneseq
          %v244 = vshrl.u32 %v243, 7
          %v245 = vsub.s32 %v242, %v244
          %v246 = vrot.slane %v181, %v245
          %vm247 = vcmask 523712
          %v248 = vsel %vm247, %v246, %v241
          %vm250 = vcmask 516096
          %251 = vst.msk [vmem:[%s148] sm:$0x1] %vm250, %v248
        $region32: #{global_max_pooling.1} parent=23 // pred_fallthru
          _
        %p252 = scmp.gt.s32.totalorder %s20, 0
        // Predicated region
        $region33: #{global_max_pooling.1} parent=23 // pred_check
          %p253 = pneg %p252
        $region34: #{global_max_pooling.1} parent=23 // pred_check_branch
          %255 = sbr.rel (%p253) target = $region36
        $region35: #{global_max_pooling.1} parent=23 // pred_region
          %v256 = vld [vmem:[%s148] sm:$0x1]
          %v265 = vlaneseq
          %v266 = vshrl.u32 %v265, 7
          %v267 = vsub.s32 0, %v266
          %v268 = vrot.slane %v160, %v267
          %v269 = vlaneseq
          %v270 = vshrl.u32 %v269, 7
          %v271 = vsub.s32 1, %v270
          %v272 = vrot.slane %v160, %v271
          %v273 = vlaneseq
          %v274 = vshrl.u32 %v273, 7
          %v275 = vsub.s32 2, %v274
          %v276 = vrot.slane %v160, %v275
          %v277 = vlaneseq
          %v278 = vshrl.u32 %v277, 7
          %v279 = vsub.s32 3, %v278
          %v280 = vrot.slane %v160, %v279
          %v281 = vlaneseq
          %v282 = vshrl.u32 %v281, 7
          %v283 = vsub.s32 4, %v282
          %v284 = vrot.slane %v160, %v283
          %v285 = vlaneseq
          %v286 = vshrl.u32 %v285, 7
          %v287 = vsub.s32 5, %v286
          %v288 = vrot.slane %v160, %v287
          %v289 = vlaneseq
          %v290 = vshrl.u32 %v289, 7
          %v291 = vsub.s32 6, %v290
          %v292 = vrot.slane %v160, %v291
          %v293 = vlaneseq
          %v294 = vshrl.u32 %v293, 7
          %v295 = vsub.s32 7, %v294
          %v296 = vrot.slane %v160, %v295
          %v297 = vlaneseq
          %v298 = vshrl.u32 %v297, 7
          %v299 = vsub.s32 0, %v298
          %v300 = vrot.slane %v163, %v299
          %v301 = vlaneseq
          %v302 = vshrl.u32 %v301, 7
          %v303 = vsub.s32 1, %v302
          %v304 = vrot.slane %v163, %v303
          %v305 = vlaneseq
          %v306 = vshrl.u32 %v305, 7
          %v307 = vsub.s32 2, %v306
          %v308 = vrot.slane %v163, %v307
          %v309 = vlaneseq
          %v310 = vshrl.u32 %v309, 7
          %v311 = vsub.s32 3, %v310
          %v312 = vrot.slane %v163, %v311
          %v313 = vlaneseq
          %v314 = vshrl.u32 %v313, 7
          %v315 = vsub.s32 4, %v314
          %v316 = vrot.slane %v163, %v315
          %v317 = vlaneseq
          %v318 = vshrl.u32 %v317, 7
          %v319 = vsub.s32 5, %v318
          %v320 = vrot.slane %v163, %v319
          %v321 = vlaneseq
          %v322 = vshrl.u32 %v321, 7
          %v323 = vsub.s32 6, %v322
          %v324 = vrot.slane %v163, %v323
          %v325 = vlaneseq
          %v326 = vshrl.u32 %v325, 7
          %v327 = vsub.s32 7, %v326
          %v328 = vrot.slane %v163, %v327
          %v329 = vlaneseq
          %v330 = vshrl.u32 %v329, 7
          %v331 = vsub.s32 0, %v330
          %v332 = vrot.slane %v166, %v331
          %v333 = vlaneseq
          %v334 = vshrl.u32 %v333, 7
          %v335 = vsub.s32 1, %v334
          %v336 = vrot.slane %v166, %v335
          %v337 = vlaneseq
          %v338 = vshrl.u32 %v337, 7
          %v339 = vsub.s32 2, %v338
          %v340 = vrot.slane %v166, %v339
          %v341 = vlaneseq
          %v342 = vshrl.u32 %v341, 7
          %v343 = vsub.s32 3, %v342
          %v344 = vrot.slane %v166, %v343
          %v345 = vlaneseq
          %v346 = vshrl.u32 %v345, 7
          %v347 = vsub.s32 4, %v346
          %v348 = vrot.slane %v166, %v347
          %v349 = vlaneseq
          %v350 = vshrl.u32 %v349, 7
          %v351 = vsub.s32 5, %v350
          %v352 = vrot.slane %v166, %v351
          %v353 = vlaneseq
          %v354 = vshrl.u32 %v353, 7
          %v355 = vsub.s32 6, %v354
          %v356 = vrot.slane %v166, %v355
          %v357 = vlaneseq
          %v358 = vshrl.u32 %v357, 7
          %v359 = vsub.s32 7, %v358
          %v360 = vrot.slane %v166, %v359
          %v361 = vlaneseq
          %v362 = vshrl.u32 %v361, 7
          %v363 = vsub.s32 0, %v362
          %v364 = vrot.slane %v169, %v363
          %v365 = vlaneseq
          %v366 = vshrl.u32 %v365, 7
          %v367 = vsub.s32 1, %v366
          %v368 = vrot.slane %v169, %v367
          %v369 = vlaneseq
          %v370 = vshrl.u32 %v369, 7
          %v371 = vsub.s32 2, %v370
          %v372 = vrot.slane %v169, %v371
          %v373 = vlaneseq
          %v374 = vshrl.u32 %v373, 7
          %v375 = vsub.s32 3, %v374
          %v376 = vrot.slane %v169, %v375
          %v377 = vlaneseq
          %v378 = vshrl.u32 %v377, 7
          %v379 = vsub.s32 4, %v378
          %v380 = vrot.slane %v169, %v379
          %v381 = vlaneseq
          %v382 = vshrl.u32 %v381, 7
          %v383 = vsub.s32 5, %v382
          %v384 = vrot.slane %v169, %v383
          %v385 = vlaneseq
          %v386 = vshrl.u32 %v385, 7
          %v387 = vsub.s32 6, %v386
          %v388 = vrot.slane %v169, %v387
          %v389 = vlaneseq
          %v390 = vshrl.u32 %v389, 7
          %v391 = vsub.s32 7, %v390
          %v392 = vrot.slane %v169, %v391
          %v393 = vlaneseq
          %v394 = vshrl.u32 %v393, 7
          %v395 = vsub.s32 0, %v394
          %v396 = vrot.slane %v172, %v395
          %v397 = vlaneseq
          %v398 = vshrl.u32 %v397, 7
          %v399 = vsub.s32 1, %v398
          %v400 = vrot.slane %v172, %v399
          %v401 = vlaneseq
          %v402 = vshrl.u32 %v401, 7
          %v403 = vsub.s32 2, %v402
          %v404 = vrot.slane %v172, %v403
          %v405 = vlaneseq
          %v406 = vshrl.u32 %v405, 7
          %v407 = vsub.s32 3, %v406
          %v408 = vrot.slane %v172, %v407
          %v409 = vlaneseq
          %v410 = vshrl.u32 %v409, 7
          %v411 = vsub.s32 4, %v410
          %v412 = vrot.slane %v172, %v411
          %v413 = vlaneseq
          %v414 = vshrl.u32 %v413, 7
          %v415 = vsub.s32 5, %v414
          %v416 = vrot.slane %v172, %v415
          %v417 = vlaneseq
          %v418 = vshrl.u32 %v417, 7
          %v419 = vsub.s32 6, %v418
          %v420 = vrot.slane %v172, %v419
          %v421 = vlaneseq
          %v422 = vshrl.u32 %v421, 7
          %v423 = vsub.s32 7, %v422
          %v424 = vrot.slane %v172, %v423
          %v425 = vlaneseq
          %v426 = vshrl.u32 %v425, 7
          %v427 = vsub.s32 0, %v426
          %v428 = vrot.slane %v175, %v427
          %v429 = vlaneseq
          %v430 = vshrl.u32 %v429, 7
          %v431 = vsub.s32 1, %v430
          %v432 = vrot.slane %v175, %v431
          %v433 = vlaneseq
          %v434 = vshrl.u32 %v433, 7
          %v435 = vsub.s32 2, %v434
          %v436 = vrot.slane %v175, %v435
          %v437 = vlaneseq
          %v438 = vshrl.u32 %v437, 7
          %v439 = vsub.s32 3, %v438
          %v440 = vrot.slane %v175, %v439
          %v441 = vlaneseq
          %v442 = vshrl.u32 %v441, 7
          %v443 = vsub.s32 4, %v442
          %v444 = vrot.slane %v175, %v443
          %v445 = vlaneseq
          %v446 = vshrl.u32 %v445, 7
          %v447 = vsub.s32 5, %v446
          %v448 = vrot.slane %v175, %v447
          %v449 = vlaneseq
          %v450 = vshrl.u32 %v449, 7
          %v451 = vsub.s32 6, %v450
          %v452 = vrot.slane %v175, %v451
          %v453 = vlaneseq
          %v454 = vshrl.u32 %v453, 7
          %v455 = vsub.s32 7, %v454
          %v456 = vrot.slane %v175, %v455
          %v457 = vlaneseq
          %v458 = vshrl.u32 %v457, 7
          %v459 = vsub.s32 0, %v458
          %v460 = vrot.slane %v178, %v459
          %v461 = vlaneseq
          %v462 = vshrl.u32 %v461, 7
          %v463 = vsub.s32 1, %v462
          %v464 = vrot.slane %v178, %v463
          %v465 = vlaneseq
          %v466 = vshrl.u32 %v465, 7
          %v467 = vsub.s32 2, %v466
          %v468 = vrot.slane %v178, %v467
          %v469 = vlaneseq
          %v470 = vshrl.u32 %v469, 7
          %v471 = vsub.s32 3, %v470
          %v472 = vrot.slane %v178, %v471
          %v473 = vlaneseq
          %v474 = vshrl.u32 %v473, 7
          %v475 = vsub.s32 4, %v474
          %v476 = vrot.slane %v178, %v475
          %v477 = vlaneseq
          %v478 = vshrl.u32 %v477, 7
          %v479 = vsub.s32 5, %v478
          %v480 = vrot.slane %v178, %v479
          %v481 = vlaneseq
          %v482 = vshrl.u32 %v481, 7
          %v483 = vsub.s32 6, %v482
          %v484 = vrot.slane %v178, %v483
          %v485 = vlaneseq
          %v486 = vshrl.u32 %v485, 7
          %v487 = vsub.s32 7, %v486
          %v488 = vrot.slane %v178, %v487
          %v489 = vlaneseq
          %v490 = vshrl.u32 %v489, 7
          %v491 = vsub.s32 0, %v490
          %v492 = vrot.slane %v181, %v491
          %v493 = vlaneseq
          %v494 = vshrl.u32 %v493, 7
          %v495 = vsub.s32 1, %v494
          %v496 = vrot.slane %v181, %v495
          %v497 = vlaneseq
          %v498 = vshrl.u32 %v497, 7
          %v499 = vsub.s32 2, %v498
          %v500 = vrot.slane %v181, %v499
          %v501 = vlaneseq
          %v502 = vshrl.u32 %v501, 7
          %v503 = vsub.s32 3, %v502
          %v504 = vrot.slane %v181, %v503
          %v505 = vlaneseq
          %v506 = vshrl.u32 %v505, 7
          %v507 = vsub.s32 4, %v506
          %v508 = vrot.slane %v181, %v507
          %v509 = vlaneseq
          %v510 = vshrl.u32 %v509, 7
          %v511 = vsub.s32 5, %v510
          %v512 = vrot.slane %v181, %v511
          %v513 = vlaneseq
          %v514 = vshrl.u32 %v513, 7
          %v515 = vsub.s32 6, %v514
          %v516 = vrot.slane %v181, %v515
          %v517 = vlaneseq
          %v518 = vshrl.u32 %v517, 7
          %v519 = vsub.s32 7, %v518
          %v520 = vrot.slane %v181, %v519
          %v521 = vcombine.low %v268, %v272
          %v522 = vcombine.low %v276, %v280
          %v523 = vcombine.low %v284, %v288
          %v524 = vcombine.low %v292, %v296
          %v526 = vunpack.c.l.s4 1966171168
          %v527 = vunpack.c.0.s8 %v526
          %v528 = vlaneseq
          %v529 = vshrl.u32 %v528, 7
          %v530 = vsub.s32 %v527, %v529
          %v531 = vrot.slane %v521, %v530
          %v533 = vunpack.c.l.s4 1966171168
          %v534 = vunpack.c.0.s8 %v533
          %v535 = vlaneseq
          %v536 = vshrl.u32 %v535, 7
          %v537 = vsub.s32 %v534, %v536
          %v538 = vrot.slane %v522, %v537
          %v540 = vunpack.c.l.s4 1966171168
          %v541 = vunpack.c.0.s8 %v540
          %v542 = vlaneseq
          %v543 = vshrl.u32 %v542, 7
          %v544 = vsub.s32 %v541, %v543
          %v545 = vrot.slane %v523, %v544
          %v547 = vunpack.c.l.s4 1966171168
          %v548 = vunpack.c.0.s8 %v547
          %v549 = vlaneseq
          %v550 = vshrl.u32 %v549, 7
          %v551 = vsub.s32 %v548, %v550
          %v552 = vrot.slane %v524, %v551
          %v553 = vcombine.low %v531, %v538
          %v554 = vcombine.low %v545, %v552
          %v556 = vunpack.c.l.s4 1966171168
          %v557 = vunpack.c.0.s8 %v556
          %v558 = vlaneseq
          %v559 = vshrl.u32 %v558, 7
          %v560 = vsub.s32 %v557, %v559
          %v561 = vrot.slane %v553, %v560
          %v563 = vunpack.c.l.s4 1966171168
          %v564 = vunpack.c.0.s8 %v563
          %v565 = vlaneseq
          %v566 = vshrl.u32 %v565, 7
          %v567 = vsub.s32 %v564, %v566
          %v568 = vrot.slane %v554, %v567
          %v569 = vcombine.low %v561, %v568
          %v570 = vcombine.low %v300, %v304
          %v571 = vcombine.low %v308, %v312
          %v572 = vcombine.low %v316, %v320
          %v573 = vcombine.low %v324, %v328
          %v575 = vunpack.c.l.s4 1966171168
          %v576 = vunpack.c.0.s8 %v575
          %v577 = vlaneseq
          %v578 = vshrl.u32 %v577, 7
          %v579 = vsub.s32 %v576, %v578
          %v580 = vrot.slane %v570, %v579
          %v582 = vunpack.c.l.s4 1966171168
          %v583 = vunpack.c.0.s8 %v582
          %v584 = vlaneseq
          %v585 = vshrl.u32 %v584, 7
          %v586 = vsub.s32 %v583, %v585
          %v587 = vrot.slane %v571, %v586
          %v589 = vunpack.c.l.s4 1966171168
          %v590 = vunpack.c.0.s8 %v589
          %v591 = vlaneseq
          %v592 = vshrl.u32 %v591, 7
          %v593 = vsub.s32 %v590, %v592
          %v594 = vrot.slane %v572, %v593
          %v596 = vunpack.c.l.s4 1966171168
          %v597 = vunpack.c.0.s8 %v596
          %v598 = vlaneseq
          %v599 = vshrl.u32 %v598, 7
          %v600 = vsub.s32 %v597, %v599
          %v601 = vrot.slane %v573, %v600
          %v602 = vcombine.low %v580, %v587
          %v603 = vcombine.low %v594, %v601
          %v605 = vunpack.c.l.s4 1966171168
          %v606 = vunpack.c.0.s8 %v605
          %v607 = vlaneseq
          %v608 = vshrl.u32 %v607, 7
          %v609 = vsub.s32 %v606, %v608
          %v610 = vrot.slane %v602, %v609
          %v612 = vunpack.c.l.s4 1966171168
          %v613 = vunpack.c.0.s8 %v612
          %v614 = vlaneseq
          %v615 = vshrl.u32 %v614, 7
          %v616 = vsub.s32 %v613, %v615
          %v617 = vrot.slane %v603, %v616
          %v618 = vcombine.low %v610, %v617
          %v619 = vcombine.low %v332, %v336
          %v620 = vcombine.low %v340, %v344
          %v621 = vcombine.low %v348, %v352
          %v622 = vcombine.low %v356, %v360
          %v624 = vunpack.c.l.s4 1966171168
          %v625 = vunpack.c.0.s8 %v624
          %v626 = vlaneseq
          %v627 = vshrl.u32 %v626, 7
          %v628 = vsub.s32 %v625, %v627
          %v629 = vrot.slane %v619, %v628
          %v631 = vunpack.c.l.s4 1966171168
          %v632 = vunpack.c.0.s8 %v631
          %v633 = vlaneseq
          %v634 = vshrl.u32 %v633, 7
          %v635 = vsub.s32 %v632, %v634
          %v636 = vrot.slane %v620, %v635
          %v638 = vunpack.c.l.s4 1966171168
          %v639 = vunpack.c.0.s8 %v638
          %v640 = vlaneseq
          %v641 = vshrl.u32 %v640, 7
          %v642 = vsub.s32 %v639, %v641
          %v643 = vrot.slane %v621, %v642
          %v645 = vunpack.c.l.s4 1966171168
          %v646 = vunpack.c.0.s8 %v645
          %v647 = vlaneseq
          %v648 = vshrl.u32 %v647, 7
          %v649 = vsub.s32 %v646, %v648
          %v650 = vrot.slane %v622, %v649
          %v651 = vcombine.low %v629, %v636
          %v652 = vcombine.low %v643, %v650
          %v654 = vunpack.c.l.s4 1966171168
          %v655 = vunpack.c.0.s8 %v654
          %v656 = vlaneseq
          %v657 = vshrl.u32 %v656, 7
          %v658 = vsub.s32 %v655, %v657
          %v659 = vrot.slane %v651, %v658
          %v661 = vunpack.c.l.s4 1966171168
          %v662 = vunpack.c.0.s8 %v661
          %v663 = vlaneseq
          %v664 = vshrl.u32 %v663, 7
          %v665 = vsub.s32 %v662, %v664
          %v666 = vrot.slane %v652, %v665
          %v667 = vcombine.low %v659, %v666
          %v668 = vcombine.low %v364, %v368
          %v669 = vcombine.low %v372, %v376
          %v670 = vcombine.low %v380, %v384
          %v671 = vcombine.low %v388, %v392
          %v673 = vunpack.c.l.s4 1966171168
          %v674 = vunpack.c.0.s8 %v673
          %v675 = vlaneseq
          %v676 = vshrl.u32 %v675, 7
          %v677 = vsub.s32 %v674, %v676
          %v678 = vrot.slane %v668, %v677
          %v680 = vunpack.c.l.s4 1966171168
          %v681 = vunpack.c.0.s8 %v680
          %v682 = vlaneseq
          %v683 = vshrl.u32 %v682, 7
          %v684 = vsub.s32 %v681, %v683
          %v685 = vrot.slane %v669, %v684
          %v687 = vunpack.c.l.s4 1966171168
          %v688 = vunpack.c.0.s8 %v687
          %v689 = vlaneseq
          %v690 = vshrl.u32 %v689, 7
          %v691 = vsub.s32 %v688, %v690
          %v692 = vrot.slane %v670, %v691
          %v694 = vunpack.c.l.s4 1966171168
          %v695 = vunpack.c.0.s8 %v694
          %v696 = vlaneseq
          %v697 = vshrl.u32 %v696, 7
          %v698 = vsub.s32 %v695, %v697
          %v699 = vrot.slane %v671, %v698
          %v700 = vcombine.low %v678, %v685
          %v701 = vcombine.low %v692, %v699
          %v703 = vunpack.c.l.s4 1966171168
          %v704 = vunpack.c.0.s8 %v703
          %v705 = vlaneseq
          %v706 = vshrl.u32 %v705, 7
          %v707 = vsub.s32 %v704, %v706
          %v708 = vrot.slane %v700, %v707
          %v710 = vunpack.c.l.s4 1966171168
          %v711 = vunpack.c.0.s8 %v710
          %v712 = vlaneseq
          %v713 = vshrl.u32 %v712, 7
          %v714 = vsub.s32 %v711, %v713
          %v715 = vrot.slane %v701, %v714
          %v716 = vcombine.low %v708, %v715
          %v717 = vcombine.low %v396, %v400
          %v718 = vcombine.low %v404, %v408
          %v719 = vcombine.low %v412, %v416
          %v720 = vcombine.low %v420, %v424
          %v722 = vunpack.c.l.s4 1966171168
          %v723 = vunpack.c.0.s8 %v722
          %v724 = vlaneseq
          %v725 = vshrl.u32 %v724, 7
          %v726 = vsub.s32 %v723, %v725
          %v727 = vrot.slane %v717, %v726
          %v729 = vunpack.c.l.s4 1966171168
          %v730 = vunpack.c.0.s8 %v729
          %v731 = vlaneseq
          %v732 = vshrl.u32 %v731, 7
          %v733 = vsub.s32 %v730, %v732
          %v734 = vrot.slane %v718, %v733
          %v736 = vunpack.c.l.s4 1966171168
          %v737 = vunpack.c.0.s8 %v736
          %v738 = vlaneseq
          %v739 = vshrl.u32 %v738, 7
          %v740 = vsub.s32 %v737, %v739
          %v741 = vrot.slane %v719, %v740
          %v743 = vunpack.c.l.s4 1966171168
          %v744 = vunpack.c.0.s8 %v743
          %v745 = vlaneseq
          %v746 = vshrl.u32 %v745, 7
          %v747 = vsub.s32 %v744, %v746
          %v748 = vrot.slane %v720, %v747
          %v749 = vcombine.low %v727, %v734
          %v750 = vcombine.low %v741, %v748
          %v752 = vunpack.c.l.s4 1966171168
          %v753 = vunpack.c.0.s8 %v752
          %v754 = vlaneseq
          %v755 = vshrl.u32 %v754, 7
          %v756 = vsub.s32 %v753, %v755
          %v757 = vrot.slane %v749, %v756
          %v759 = vunpack.c.l.s4 1966171168
          %v760 = vunpack.c.0.s8 %v759
          %v761 = vlaneseq
          %v762 = vshrl.u32 %v761, 7
          %v763 = vsub.s32 %v760, %v762
          %v764 = vrot.slane %v750, %v763
          %v765 = vcombine.low %v757, %v764
          %v766 = vcombine.low %v428, %v432
          %v767 = vcombine.low %v436, %v440
          %v768 = vcombine.low %v444, %v448
          %v769 = vcombine.low %v452, %v456
          %v771 = vunpack.c.l.s4 1966171168
          %v772 = vunpack.c.0.s8 %v771
          %v773 = vlaneseq
          %v774 = vshrl.u32 %v773, 7
          %v775 = vsub.s32 %v772, %v774
          %v776 = vrot.slane %v766, %v775
          %v778 = vunpack.c.l.s4 1966171168
          %v779 = vunpack.c.0.s8 %v778
          %v780 = vlaneseq
          %v781 = vshrl.u32 %v780, 7
          %v782 = vsub.s32 %v779, %v781
          %v783 = vrot.slane %v767, %v782
          %v785 = vunpack.c.l.s4 1966171168
          %v786 = vunpack.c.0.s8 %v785
          %v787 = vlaneseq
          %v788 = vshrl.u32 %v787, 7
          %v789 = vsub.s32 %v786, %v788
          %v790 = vrot.slane %v768, %v789
          %v792 = vunpack.c.l.s4 1966171168
          %v793 = vunpack.c.0.s8 %v792
          %v794 = vlaneseq
          %v795 = vshrl.u32 %v794, 7
          %v796 = vsub.s32 %v793, %v795
          %v797 = vrot.slane %v769, %v796
          %v798 = vcombine.low %v776, %v783
          %v799 = vcombine.low %v790, %v797
          %v801 = vunpack.c.l.s4 1966171168
          %v802 = vunpack.c.0.s8 %v801
          %v803 = vlaneseq
          %v804 = vshrl.u32 %v803, 7
          %v805 = vsub.s32 %v802, %v804
          %v806 = vrot.slane %v798, %v805
          %v808 = vunpack.c.l.s4 1966171168
          %v809 = vunpack.c.0.s8 %v808
          %v810 = vlaneseq
          %v811 = vshrl.u32 %v810, 7
          %v812 = vsub.s32 %v809, %v811
          %v813 = vrot.slane %v799, %v812
          %v814 = vcombine.low %v806, %v813
          %v815 = vcombine.low %v460, %v464
          %v816 = vcombine.low %v468, %v472
          %v817 = vcombine.low %v476, %v480
          %v818 = vcombine.low %v484, %v488
          %v820 = vunpack.c.l.s4 1966171168
          %v821 = vunpack.c.0.s8 %v820
          %v822 = vlaneseq
          %v823 = vshrl.u32 %v822, 7
          %v824 = vsub.s32 %v821, %v823
          %v825 = vrot.slane %v815, %v824
          %v827 = vunpack.c.l.s4 1966171168
          %v828 = vunpack.c.0.s8 %v827
          %v829 = vlaneseq
          %v830 = vshrl.u32 %v829, 7
          %v831 = vsub.s32 %v828, %v830
          %v832 = vrot.slane %v816, %v831
          %v834 = vunpack.c.l.s4 1966171168
          %v835 = vunpack.c.0.s8 %v834
          %v836 = vlaneseq
          %v837 = vshrl.u32 %v836, 7
          %v838 = vsub.s32 %v835, %v837
          %v839 = vrot.slane %v817, %v838
          %v841 = vunpack.c.l.s4 1966171168
          %v842 = vunpack.c.0.s8 %v841
          %v843 = vlaneseq
          %v844 = vshrl.u32 %v843, 7
          %v845 = vsub.s32 %v842, %v844
          %v846 = vrot.slane %v818, %v845
          %v847 = vcombine.low %v825, %v832
          %v848 = vcombine.low %v839, %v846
          %v850 = vunpack.c.l.s4 1966171168
          %v851 = vunpack.c.0.s8 %v850
          %v852 = vlaneseq
          %v853 = vshrl.u32 %v852, 7
          %v854 = vsub.s32 %v851, %v853
          %v855 = vrot.slane %v847, %v854
          %v857 = vunpack.c.l.s4 1966171168
          %v858 = vunpack.c.0.s8 %v857
          %v859 = vlaneseq
          %v860 = vshrl.u32 %v859, 7
          %v861 = vsub.s32 %v858, %v860
          %v862 = vrot.slane %v848, %v861
          %v863 = vcombine.low %v855, %v862
          %v864 = vcombine.low %v492, %v496
          %v865 = vcombine.low %v500, %v504
          %v866 = vcombine.low %v508, %v512
          %v867 = vcombine.low %v516, %v520
          %v869 = vunpack.c.l.s4 1966171168
          %v870 = vunpack.c.0.s8 %v869
          %v871 = vlaneseq
          %v872 = vshrl.u32 %v871, 7
          %v873 = vsub.s32 %v870, %v872
          %v874 = vrot.slane %v864, %v873
          %v876 = vunpack.c.l.s4 1966171168
          %v877 = vunpack.c.0.s8 %v876
          %v878 = vlaneseq
          %v879 = vshrl.u32 %v878, 7
          %v880 = vsub.s32 %v877, %v879
          %v881 = vrot.slane %v865, %v880
          %v883 = vunpack.c.l.s4 1966171168
          %v884 = vunpack.c.0.s8 %v883
          %v885 = vlaneseq
          %v886 = vshrl.u32 %v885, 7
          %v887 = vsub.s32 %v884, %v886
          %v888 = vrot.slane %v866, %v887
          %v890 = vunpack.c.l.s4 1966171168
          %v891 = vunpack.c.0.s8 %v890
          %v892 = vlaneseq
          %v893 = vshrl.u32 %v892, 7
          %v894 = vsub.s32 %v891, %v893
          %v895 = vrot.slane %v867, %v894
          %v896 = vcombine.low %v874, %v881
          %v897 = vcombine.low %v888, %v895
          %v899 = vunpack.c.l.s4 1966171168
          %v900 = vunpack.c.0.s8 %v899
          %v901 = vlaneseq
          %v902 = vshrl.u32 %v901, 7
          %v903 = vsub.s32 %v900, %v902
          %v904 = vrot.slane %v896, %v903
          %v906 = vunpack.c.l.s4 1966171168
          %v907 = vunpack.c.0.s8 %v906
          %v908 = vlaneseq
          %v909 = vshrl.u32 %v908, 7
          %v910 = vsub.s32 %v907, %v909
          %v911 = vrot.slane %v897, %v910
          %v912 = vcombine.low %v904, %v911
          %913 = vset.pattern.permute.xlu0 0
          %914 = vperm.xlu0 %913, %v569
          %v915 = vpop.permute.xlu0 %914
          %916 = vset.pattern.permute.xlu0 0
          %917 = vperm.xlu0 %916, %v618
          %v918 = vpop.permute.xlu0 %917
          %919 = vset.pattern.permute.xlu0 0
          %920 = vperm.xlu0 %919, %v667
          %v921 = vpop.permute.xlu0 %920
          %922 = vset.pattern.permute.xlu0 0
          %923 = vperm.xlu0 %922, %v716
          %v924 = vpop.permute.xlu0 %923
          %925 = vset.pattern.permute.xlu0 0
          %926 = vperm.xlu0 %925, %v765
          %v927 = vpop.permute.xlu0 %926
          %928 = vset.pattern.permute.xlu0 0
          %929 = vperm.xlu0 %928, %v814
          %v930 = vpop.permute.xlu0 %929
          %931 = vset.pattern.permute.xlu0 0
          %932 = vperm.xlu0 %931, %v863
          %v933 = vpop.permute.xlu0 %932
          %934 = vset.pattern.permute.xlu0 0
          %935 = vperm.xlu0 %934, %v912
          %v936 = vpop.permute.xlu0 %935
          %v937 = vlaneseq
          %v938 = vand.u32 %v937, 127
          %v939 = vlaneseq
          %v940 = vshrl.u32 %v939, 7
          %v941 = vsub.s32 %v938, %v940
          %v942 = vrot.slane %v915, %v941
          %v943 = vadd.s32 %v938, 4294967288
          %v944 = vlaneseq
          %v945 = vshrl.u32 %v944, 7
          %v946 = vsub.s32 %v943, %v945
          %v947 = vrot.slane %v918, %v946
          %vm948 = vcmask 130112
          %v949 = vsel %vm948, %v947, %v942
          %v950 = vadd.s32 %v938, 4294967280
          %v951 = vlaneseq
          %v952 = vshrl.u32 %v951, 7
          %v953 = vsub.s32 %v950, %v952
          %v954 = vrot.slane %v921, %v953
          %vm955 = vcmask 195712
          %v956 = vsel %vm955, %v954, %v949
          %v957 = vadd.s32 %v938, 4294967272
          %v958 = vlaneseq
          %v959 = vshrl.u32 %v958, 7
          %v960 = vsub.s32 %v957, %v959
          %v961 = vrot.slane %v924, %v960
          %vm962 = vcmask 261312
          %v963 = vsel %vm962, %v961, %v956
          %v964 = vadd.s32 %v938, 4294967264
          %v965 = vlaneseq
          %v966 = vshrl.u32 %v965, 7
          %v967 = vsub.s32 %v964, %v966
          %v968 = vrot.slane %v927, %v967
          %vm969 = vcmask 326912
          %v970 = vsel %vm969, %v968, %v963
          %v971 = vadd.s32 %v938, 4294967256
          %v972 = vlaneseq
          %v973 = vshrl.u32 %v972, 7
          %v974 = vsub.s32 %v971, %v973
          %v975 = vrot.slane %v930, %v974
          %vm976 = vcmask 392512
          %v977 = vsel %vm976, %v975, %v970
          %v978 = vadd.s32 %v938, 4294967248
          %v979 = vlaneseq
          %v980 = vshrl.u32 %v979, 7
          %v981 = vsub.s32 %v978, %v980
          %v982 = vrot.slane %v933, %v981
          %vm983 = vcmask 458112
          %v984 = vsel %vm983, %v982, %v977
          %v985 = vadd.s32 %v938, 4294967240
          %v986 = vlaneseq
          %v987 = vshrl.u32 %v986, 7
          %v988 = vsub.s32 %v985, %v987
          %v989 = vrot.slane %v936, %v988
          %vm990 = vcmask 523712
          %v991 = vsel %vm990, %v989, %v984
          %v993 = vunpack.c.l.s4 1966171168
          %v994 = vunpack.c.0.s8 %v993
          %v995 = vlaneseq
          %v996 = vshrl.u32 %v995, 7
          %v997 = vsub.s32 %v994, %v996
          %v998 = vrot.slane %v991, %v997
          %v1000 = vunpack.c.l.s4 1966171168
          %v1001 = vunpack.c.0.s8 %v1000
          %v1002 = vlaneseq
          %v1003 = vshrl.u32 %v1002, 7
          %v1004 = vsub.s32 %v1001, %v1003
          %v1005 = vrot.slane %v998, %v1004
          %v1007 = vmax.f32 %v256, %v1005
          %vm1008 = vcmask 516096
          %1009 = vst.msk [vmem:[%s148] sm:$0x1] %vm1008, %v1007
        $region36: #{global_max_pooling.1} parent=23 // pred_fallthru
          _
        %p1010 = scmp.lt.s32.totalorder %s19, 1
        %s1011 = scalar_select %p1010, %s19, 1
        %s1012 = scalar_lea.vmem %s1, %s1011
        // Predicated region
        $region37: #{global_max_pooling.1} parent=23 // pred_check
          %p1013 = pneg %p73
        $region38: #{global_max_pooling.1} parent=23 // pred_check_branch
          %1015 = sbr.rel (%p1013) target = $region40
        $region39: #{global_max_pooling.1} parent=23 // pred_region
          _
        $region40: #{global_max_pooling.1} parent=23 // pred_fallthru
          _
      $region24: #{global_max_pooling.1} parent=5 // pred_fallthru
        _
      %p1016 = scmp.le.s32.totalorder 2, %s10
      // Predicated region
      $region41: #{global_max_pooling.1} parent=5 // pred_check
        %p1017 = pneg %p1016
      $region42: #{global_max_pooling.1} parent=5 // pred_check_branch
        %1019 = sbr.rel (%p1017) target = $region44
      $region43: #{global_max_pooling.1} parent=5 // pred_region
        %s1020 = ssub.s32 %s10, 2
        // Predicated region
        $region45: #{global_max_pooling.1} parent=43 // pred_check
          %p1021 = pneg %p79
        $region46: #{global_max_pooling.1} parent=43 // pred_check_branch
          %1023 = sbr.rel (%p1021) target = $region48
        $region47: #{global_max_pooling.1} parent=43 // pred_region
          %p1024 = scmp.lt.s32.totalorder %s21, 1
          %s1025 = scalar_select %p1024, %s21, 1
          %s1026 = scalar_lea.vmem %s1, %s1025
        $region48: #{global_max_pooling.1} parent=43 // pred_fallthru
          _
      $region44: #{global_max_pooling.1} parent=5 // pred_fallthru
        _
    $region6: #{global_max_pooling.1} parent=1 // loop_footer
      %s14 = sadd.s32 1, %s10
    $region7: #{global_max_pooling.1} parent=1 // loop_footer_branch
      %9 = sbr.rel target = $region3
    $region8: #{global_max_pooling.1} parent=1 // loop_exit
      _
    %1027 = vsyncpa [#allocation3], 1
    %s1028 = scalar_lea.sflag [#allocation3], 1
    %1029 = vsyncpa %s1028, 1

</llo_original>
